<compile_context>
chip_gen: v5e
topology: v5e:2x2
jax: 0.10.0
libtpu: 0.0.40
codegen_flags: <defaults>
</compile_context>

<pallas_src>
import functools
import math

import jax
import jax.numpy as jnp
from jax.experimental import pallas as pl
from jax.experimental.pallas import tpu as pltpu


def _rotary_kernel(coords_ref, inv_ref, out_ref, *, K, dim):
    # coords_ref: [tile_r, K]      f32  (K coordinates per lane-dense out row)
    # inv_ref:    [1, dim]         f32  (= cat(inv_freq, inv_freq) * scale/min_freq)
    # out_ref:    [tile_r, K*dim]  out dtype (lane-dense, K*dim % 128 == 0)
    inv_row = inv_ref[...]                                   # (1, dim)
    for k in range(K):                                       # static, unrolled
        strip = coords_ref[:, k:k + 1] * inv_row             # (tile_r, dim) VPU bcast-mul
        out_ref[:, k * dim:(k + 1) * dim] = strip.astype(out_ref.dtype)


def rotary_embedding(coordinates, dim, *, min_freq=1.0 / 64, scale=1.0,
                     out_dtype=jnp.float32):
    """JAX/Pallas equivalent of RotaryEmbedding.forward.

    coordinates: float array with arbitrary leading shape [...]; returns
    [..., dim] rotary frequency embeddings (out_dtype, default float32;
    bf16 halves HBM write traffic on bandwidth-starved parts if the consumer
    tolerates it).
    """
    assert dim % 2 == 0
    coords = jnp.asarray(coordinates, dtype=jnp.float32)
    lead_shape = coords.shape
    N = math.prod(lead_shape)

    # inv_freq buffer (matches torch: 1/10000**(arange(0, dim, 2)/dim)); fold in
    # both the cat((freqs, freqs), -1) duplication and the scale/min_freq factor.
    inv_freq = 1.0 / (10000.0 ** (jnp.arange(0, dim, 2, dtype=jnp.float32) / dim))
    inv_full = (jnp.concatenate([inv_freq, inv_freq]) * (scale / min_freq))
    inv_full = inv_full.reshape(1, dim)

    # Lane-dense packing: K coordinates per presented output row so that the
    # output block's last dim LW = K*dim is a multiple of 128 lanes (~512 wide).
    k_base = 128 // math.gcd(dim, 128)
    K = k_base * max(1, 512 // (k_base * dim))
    LW = K * dim

    # Row tiling: ~512 lane-dense rows (= 512*K coordinates) per grid step.
    TILE_TARGET = 512
    N_k = pl.cdiv(N, K) * K
    R = N_k // K
    if R <= TILE_TARGET:
        tile_r, r_pad = R, R                    # single full-extent tile
    else:
        tile_r = TILE_TARGET
        r_pad = pl.cdiv(R, tile_r) * tile_r
    n_pad = r_pad * K

    coords_flat = coords.reshape(-1)
    if n_pad != N:
        coords_flat = jnp.pad(coords_flat, (0, n_pad - N))
    coords2 = coords_flat.reshape(r_pad, K)

    kernel = functools.partial(_rotary_kernel, K=K, dim=dim)
    out2 = pl.pallas_call(
        kernel,
        out_shape=jax.ShapeDtypeStruct((r_pad, LW), out_dtype),
        grid=(r_pad // tile_r,),
        in_specs=[
            pl.BlockSpec((tile_r, K), lambda i: (i, 0)),
            pl.BlockSpec((1, dim), lambda i: (0, 0)),   # constant block: resident
        ],
        out_specs=pl.BlockSpec((tile_r, LW), lambda i: (i, 0)),
        compiler_params=pltpu.CompilerParams(
            dimension_semantics=("parallel",),          # shard tiles across TCs (v7x)
            vmem_limit_bytes=32 * 1024 * 1024,
        ),
    )(coords2, inv_full)

    # [r_pad, K*dim] is bit-identical to row-major [n_pad, dim]: reshape is free.
    out = out2.reshape(n_pad, dim)
    if n_pad != N:
        out = out[:N]
    return out.reshape(*lead_shape, dim)


def _reference(coordinates, dim, *, min_freq=1.0 / 64, scale=1.0):
    inv_freq = 1.0 / (10000.0 ** (jnp.arange(0, dim, 2, dtype=jnp.float32) / dim))
    t = coordinates.astype(jnp.float32) * (scale / min_freq)
    freqs = jnp.einsum("...i,j->...ij", t, inv_freq)
    return jnp.concatenate((freqs, freqs), axis=-1)


if __name__ == "__main__":
    key = jax.random.PRNGKey(0)
    B, S, dim = 2, 8, 32
    coords = jax.random.uniform(key, (B, S), dtype=jnp.float32)

    out = rotary_embedding(coords, dim)
    out = jax.block_until_ready(out)

    ref = _reference(coords, dim)
    assert out.shape == (B, S, dim)
    assert jnp.allclose(out, ref, atol=1e-5, rtol=1e-5)
    print("KERNEL_OK")
</pallas_src>

<mosaic_0001>
module attributes {stable_mosaic.version = 11 : i64} {
  func.func @_rotary_kernel(%arg0: i32, %arg1: memref<1x16xf32, #tpu.memory_space<vmem>>, %arg2: memref<1x32xf32, #tpu.memory_space<vmem>>, %arg3: memref<1x512xf32, #tpu.memory_space<vmem>>) attributes {dimension_semantics = [#tpu.dimension_semantics<parallel>], iteration_bounds = array<i64: 1>, scalar_prefetch = 0 : i64, scratch_operands = 0 : i64, tpu.core_type = #tpu.core_type<tc>, window_params = [{transform_indices = @transform_0, window_bounds = array<i64: 1, 16>}, {pipeline_mode = #tpu.pipeline_mode<synchronous>, transform_indices = @transform_1, window_bounds = array<i64: 1, 32>}, {transform_indices = @transform_2, window_bounds = array<i64: 1, 512>}]} {
    %c0 = arith.constant 0 : index
    %c0_0 = arith.constant 0 : index
    %0 = vector.load %arg2[%c0, %c0_0] : memref<1x32xf32, #tpu.memory_space<vmem>>, vector<1x32xf32>
    %c0_1 = arith.constant 0 : index
    %c0_2 = arith.constant 0 : index
    %1 = vector.load %arg1[%c0_1, %c0_2] : memref<1x16xf32, #tpu.memory_space<vmem>>, vector<1x1xf32>
    %2 = vector.broadcast %1 : vector<1x1xf32> to vector<1x32xf32>
    %3 = arith.mulf %2, %0 : vector<1x32xf32>
    %c0_3 = arith.constant 0 : index
    %c0_4 = arith.constant 0 : index
    %4 = vector.load %arg3[%c0_3, %c0_4] : memref<1x512xf32, #tpu.memory_space<vmem>>, vector<1x32xf32>
    tpu.vector_store %arg3[%c0_3, %c0_4], %3 {strides = array<i32>} : memref<1x512xf32, #tpu.memory_space<vmem>>, vector<1x32xf32>,
    %c0_5 = arith.constant 0 : index
    %c1 = arith.constant 1 : index
    %5 = vector.load %arg1[%c0_5, %c1] : memref<1x16xf32, #tpu.memory_space<vmem>>, vector<1x1xf32>
    %6 = vector.broadcast %5 : vector<1x1xf32> to vector<1x32xf32>
    %7 = arith.mulf %6, %0 : vector<1x32xf32>
    %c0_6 = arith.constant 0 : index
    %c32 = arith.constant 32 : index
    %8 = vector.load %arg3[%c0_6, %c32] : memref<1x512xf32, #tpu.memory_space<vmem>>, vector<1x32xf32>
    tpu.vector_store %arg3[%c0_6, %c32], %7 {strides = array<i32>} : memref<1x512xf32, #tpu.memory_space<vmem>>, vector<1x32xf32>,
    %c0_7 = arith.constant 0 : index
    %c2 = arith.constant 2 : index
    %9 = vector.load %arg1[%c0_7, %c2] : memref<1x16xf32, #tpu.memory_space<vmem>>, vector<1x1xf32>
    %10 = vector.broadcast %9 : vector<1x1xf32> to vector<1x32xf32>
    %11 = arith.mulf %10, %0 : vector<1x32xf32>
    %c0_8 = arith.constant 0 : index
    %c64 = arith.constant 64 : index
    %12 = vector.load %arg3[%c0_8, %c64] : memref<1x512xf32, #tpu.memory_space<vmem>>, vector<1x32xf32>
    tpu.vector_store %arg3[%c0_8, %c64], %11 {strides = array<i32>} : memref<1x512xf32, #tpu.memory_space<vmem>>, vector<1x32xf32>,
    %c0_9 = arith.constant 0 : index
    %c3 = arith.constant 3 : index
    %13 = vector.load %arg1[%c0_9, %c3] : memref<1x16xf32, #tpu.memory_space<vmem>>, vector<1x1xf32>
    %14 = vector.broadcast %13 : vector<1x1xf32> to vector<1x32xf32>
    %15 = arith.mulf %14, %0 : vector<1x32xf32>
    %c0_10 = arith.constant 0 : index
    %c96 = arith.constant 96 : index
    %16 = vector.load %arg3[%c0_10, %c96] : memref<1x512xf32, #tpu.memory_space<vmem>>, vector<1x32xf32>
    tpu.vector_store %arg3[%c0_10, %c96], %15 {strides = array<i32>} : memref<1x512xf32, #tpu.memory_space<vmem>>, vector<1x32xf32>,
    %c0_11 = arith.constant 0 : index
    %c4 = arith.constant 4 : index
    %17 = vector.load %arg1[%c0_11, %c4] : memref<1x16xf32, #tpu.memory_space<vmem>>, vector<1x1xf32>
    %18 = vector.broadcast %17 : vector<1x1xf32> to vector<1x32xf32>
    %19 = arith.mulf %18, %0 : vector<1x32xf32>
    %c0_12 = arith.constant 0 : index
    %c128 = arith.constant 128 : index
    %20 = vector.load %arg3[%c0_12, %c128] : memref<1x512xf32, #tpu.memory_space<vmem>>, vector<1x32xf32>
    tpu.vector_store %arg3[%c0_12, %c128], %19 {strides = array<i32>} : memref<1x512xf32, #tpu.memory_space<vmem>>, vector<1x32xf32>,
    %c0_13 = arith.constant 0 : index
    %c5 = arith.constant 5 : index
    %21 = vector.load %arg1[%c0_13, %c5] : memref<1x16xf32, #tpu.memory_space<vmem>>, vector<1x1xf32>
    %22 = vector.broadcast %21 : vector<1x1xf32> to vector<1x32xf32>
    %23 = arith.mulf %22, %0 : vector<1x32xf32>
    %c0_14 = arith.constant 0 : index
    %c160 = arith.constant 160 : index
    %24 = vector.load %arg3[%c0_14, %c160] : memref<1x512xf32, #tpu.memory_space<vmem>>, vector<1x32xf32>
    tpu.vector_store %arg3[%c0_14, %c160], %23 {strides = array<i32>} : memref<1x512xf32, #tpu.memory_space<vmem>>, vector<1x32xf32>,
    %c0_15 = arith.constant 0 : index
    %c6 = arith.constant 6 : index
    %25 = vector.load %arg1[%c0_15, %c6] : memref<1x16xf32, #tpu.memory_space<vmem>>, vector<1x1xf32>
    %26 = vector.broadcast %25 : vector<1x1xf32> to vector<1x32xf32>
    %27 = arith.mulf %26, %0 : vector<1x32xf32>
    %c0_16 = arith.constant 0 : index
    %c192 = arith.constant 192 : index
    %28 = vector.load %arg3[%c0_16, %c192] : memref<1x512xf32, #tpu.memory_space<vmem>>, vector<1x32xf32>
    tpu.vector_store %arg3[%c0_16, %c192], %27 {strides = array<i32>} : memref<1x512xf32, #tpu.memory_space<vmem>>, vector<1x32xf32>,
    %c0_17 = arith.constant 0 : index
    %c7 = arith.constant 7 : index
    %29 = vector.load %arg1[%c0_17, %c7] : memref<1x16xf32, #tpu.memory_space<vmem>>, vector<1x1xf32>
    %30 = vector.broadcast %29 : vector<1x1xf32> to vector<1x32xf32>
    %31 = arith.mulf %30, %0 : vector<1x32xf32>
    %c0_18 = arith.constant 0 : index
    %c224 = arith.constant 224 : index
    %32 = vector.load %arg3[%c0_18, %c224] : memref<1x512xf32, #tpu.memory_space<vmem>>, vector<1x32xf32>
    tpu.vector_store %arg3[%c0_18, %c224], %31 {strides = array<i32>} : memref<1x512xf32, #tpu.memory_space<vmem>>, vector<1x32xf32>,
    %c0_19 = arith.constant 0 : index
    %c8 = arith.constant 8 : index
    %33 = vector.load %arg1[%c0_19, %c8] : memref<1x16xf32, #tpu.memory_space<vmem>>, vector<1x1xf32>
    %34 = vector.broadcast %33 : vector<1x1xf32> to vector<1x32xf32>
    %35 = arith.mulf %34, %0 : vector<1x32xf32>
    %c0_20 = arith.constant 0 : index
    %c256 = arith.constant 256 : index
    %36 = vector.load %arg3[%c0_20, %c256] : memref<1x512xf32, #tpu.memory_space<vmem>>, vector<1x32xf32>
    tpu.vector_store %arg3[%c0_20, %c256], %35 {strides = array<i32>} : memref<1x512xf32, #tpu.memory_space<vmem>>, vector<1x32xf32>,
    %c0_21 = arith.constant 0 : index
    %c9 = arith.constant 9 : index
    %37 = vector.load %arg1[%c0_21, %c9] : memref<1x16xf32, #tpu.memory_space<vmem>>, vector<1x1xf32>
    %38 = vector.broadcast %37 : vector<1x1xf32> to vector<1x32xf32>
    %39 = arith.mulf %38, %0 : vector<1x32xf32>
    %c0_22 = arith.constant 0 : index
    %c288 = arith.constant 288 : index
    %40 = vector.load %arg3[%c0_22, %c288] : memref<1x512xf32, #tpu.memory_space<vmem>>, vector<1x32xf32>
    tpu.vector_store %arg3[%c0_22, %c288], %39 {strides = array<i32>} : memref<1x512xf32, #tpu.memory_space<vmem>>, vector<1x32xf32>,
    %c0_23 = arith.constant 0 : index
    %c10 = arith.constant 10 : index
    %41 = vector.load %arg1[%c0_23, %c10] : memref<1x16xf32, #tpu.memory_space<vmem>>, vector<1x1xf32>
    %42 = vector.broadcast %41 : vector<1x1xf32> to vector<1x32xf32>
    %43 = arith.mulf %42, %0 : vector<1x32xf32>
    %c0_24 = arith.constant 0 : index
    %c320 = arith.constant 320 : index
    %44 = vector.load %arg3[%c0_24, %c320] : memref<1x512xf32, #tpu.memory_space<vmem>>, vector<1x32xf32>
    tpu.vector_store %arg3[%c0_24, %c320], %43 {strides = array<i32>} : memref<1x512xf32, #tpu.memory_space<vmem>>, vector<1x32xf32>,
    %c0_25 = arith.constant 0 : index
    %c11 = arith.constant 11 : index
    %45 = vector.load %arg1[%c0_25, %c11] : memref<1x16xf32, #tpu.memory_space<vmem>>, vector<1x1xf32>
    %46 = vector.broadcast %45 : vector<1x1xf32> to vector<1x32xf32>
    %47 = arith.mulf %46, %0 : vector<1x32xf32>
    %c0_26 = arith.constant 0 : index
    %c352 = arith.constant 352 : index
    %48 = vector.load %arg3[%c0_26, %c352] : memref<1x512xf32, #tpu.memory_space<vmem>>, vector<1x32xf32>
    tpu.vector_store %arg3[%c0_26, %c352], %47 {strides = array<i32>} : memref<1x512xf32, #tpu.memory_space<vmem>>, vector<1x32xf32>,
    %c0_27 = arith.constant 0 : index
    %c12 = arith.constant 12 : index
    %49 = vector.load %arg1[%c0_27, %c12] : memref<1x16xf32, #tpu.memory_space<vmem>>, vector<1x1xf32>
    %50 = vector.broadcast %49 : vector<1x1xf32> to vector<1x32xf32>
    %51 = arith.mulf %50, %0 : vector<1x32xf32>
    %c0_28 = arith.constant 0 : index
    %c384 = arith.constant 384 : index
    %52 = vector.load %arg3[%c0_28, %c384] : memref<1x512xf32, #tpu.memory_space<vmem>>, vector<1x32xf32>
    tpu.vector_store %arg3[%c0_28, %c384], %51 {strides = array<i32>} : memref<1x512xf32, #tpu.memory_space<vmem>>, vector<1x32xf32>,
    %c0_29 = arith.constant 0 : index
    %c13 = arith.constant 13 : index
    %53 = vector.load %arg1[%c0_29, %c13] : memref<1x16xf32, #tpu.memory_space<vmem>>, vector<1x1xf32>
    %54 = vector.broadcast %53 : vector<1x1xf32> to vector<1x32xf32>
    %55 = arith.mulf %54, %0 : vector<1x32xf32>
    %c0_30 = arith.constant 0 : index
    %c416 = arith.constant 416 : index
    %56 = vector.load %arg3[%c0_30, %c416] : memref<1x512xf32, #tpu.memory_space<vmem>>, vector<1x32xf32>
    tpu.vector_store %arg3[%c0_30, %c416], %55 {strides = array<i32>} : memref<1x512xf32, #tpu.memory_space<vmem>>, vector<1x32xf32>,
    %c0_31 = arith.constant 0 : index
    %c14 = arith.constant 14 : index
    %57 = vector.load %arg1[%c0_31, %c14] : memref<1x16xf32, #tpu.memory_space<vmem>>, vector<1x1xf32>
    %58 = vector.broadcast %57 : vector<1x1xf32> to vector<1x32xf32>
    %59 = arith.mulf %58, %0 : vector<1x32xf32>
    %c0_32 = arith.constant 0 : index
    %c448 = arith.constant 448 : index
    %60 = vector.load %arg3[%c0_32, %c448] : memref<1x512xf32, #tpu.memory_space<vmem>>, vector<1x32xf32>
    tpu.vector_store %arg3[%c0_32, %c448], %59 {strides = array<i32>} : memref<1x512xf32, #tpu.memory_space<vmem>>, vector<1x32xf32>,
    %c0_33 = arith.constant 0 : index
    %c15 = arith.constant 15 : index
    %61 = vector.load %arg1[%c0_33, %c15] : memref<1x16xf32, #tpu.memory_space<vmem>>, vector<1x1xf32>
    %62 = vector.broadcast %61 : vector<1x1xf32> to vector<1x32xf32>
    %63 = arith.mulf %62, %0 : vector<1x32xf32>
    %c0_34 = arith.constant 0 : index
    %c480 = arith.constant 480 : index
    %64 = vector.load %arg3[%c0_34, %c480] : memref<1x512xf32, #tpu.memory_space<vmem>>, vector<1x32xf32>
    tpu.vector_store %arg3[%c0_34, %c480], %63 {strides = array<i32>} : memref<1x512xf32, #tpu.memory_space<vmem>>, vector<1x32xf32>,
    return
  }
  func.func @transform_0(%arg0: i32) -> (i32, i32) {
    %c0_i32 = arith.constant 0 : i32
    %c0_i32_0 = arith.constant 0 : i32
    return %arg0, %c0_i32 : i32, i32
  }
  func.func @transform_1(%arg0: i32) -> (i32, i32) {
    %c0_i32 = arith.constant 0 : i32
    %c0_i32_0 = arith.constant 0 : i32
    %c0_i32_1 = arith.constant 0 : i32
    return %c0_i32, %c0_i32_0 : i32, i32
  }
  func.func @transform_2(%arg0: i32) -> (i32, i32) {
    %c0_i32 = arith.constant 0 : i32
    %c0_i32_0 = arith.constant 0 : i32
    return %arg0, %c0_i32 : i32, i32
  }
}

</mosaic_0001>

<llo_original>
// kernel: tpu_custom_call.1
$region0: #{tpu_custom_call.1}
  #allocation0 [shape = 'u32[]', space=smem, size = 0x4, offset = 0x4, fixed_abs, tag = 'smem constant byte address 0x4 - core index']
  #allocation1 [shape = 'u32[72,128]{1,0:T(1,128)}', space=vmem, size = 0x9000, scoped, tag = 'internal scratch']
  %s0 = inlined_call_operand.hbm [shape: f32[1,16], index: 0, kind: input, shape index: {}]
  %s1 = inlined_call_operand.hbm [shape: f32[1,32], index: 1, kind: input, shape index: {}]
  %s2 = inlined_call_operand.hbm [shape: f32[1,512], index: 2, kind: output, shape index: {}]
  %s3 = sld [smem:[#allocation0]]
  $region26: #{tpu_custom_call.1} parent=0
    _
  %s5 = ssub.s32 1, %s3
  %s6 = scalar_select 0, %s5, %s3
  $region1: #{tpu_custom_call.1} parent=0
    #allocation2 [shape = 'u8[512]{0}', space=vmem, size = 0x400, scoped, tag = 'input window, operand 0, single buffered']
    #allocation3 [shape = 's32[1]{0}', space=sflag, size = 0x4, scoped, tag = 'scoped memory for tpu_custom_call.1']
    #allocation4 [shape = 's32[1]{0}', space=sflag, size = 0x4, scoped, tag = 'scoped memory for tpu_custom_call.1']
    #allocation5 [shape = 'u8[512]{0}', space=vmem, size = 0x400, scoped, tag = 'input window, operand 1, single buffered']
    #allocation6 [shape = 's32[1]{0}', space=sflag, size = 0x4, scoped, tag = 'scoped memory for tpu_custom_call.1']
    #allocation7 [shape = 'u8[2048]{0}', space=vmem, size = 0x800, scoped, tag = 'output window, operand 0, single buffered']
    %7 = vsyncpa [#allocation3], 0
    %8 = vsyncpa [#allocation6], 0
    %9 = vsyncpa [#allocation4], 0
    // Predicated region
    $region2: #{tpu_custom_call.1} parent=1 // pred_check
      _
    $region3: #{tpu_custom_call.1} parent=1 // pred_check_branch
      %11 = sbr.rel (0) target = $region5
    $region4: #{tpu_custom_call.1} parent=1 // pred_region
      %13 = vsyncadd [#allocation3], 0
      %s15 = sshll.u32 %s0, 4
      %s16 = int_to_ptr.hbm [resolvable:$true] %s15
      %s17 = sshll.u32 [#allocation2], 4
      %s18 = int_to_ptr.vmem [resolvable:$true] %s17
      %20 = dma.hbm_to_vmem [thread:$0]  %s16, 16, %s18, [#allocation3]
    $region5: #{tpu_custom_call.1} parent=1 // pred_fallthru
      _
    // Predicated region
    $region6: #{tpu_custom_call.1} parent=1 // pred_check
      _
    $region7: #{tpu_custom_call.1} parent=1 // pred_check_branch
      %22 = sbr.rel (0) target = $region9
    $region8: #{tpu_custom_call.1} parent=1 // pred_region
      %24 = vsyncadd [#allocation6], 0
      %s26 = sshll.u32 %s1, 4
      %s27 = int_to_ptr.hbm [resolvable:$true] %s26
      %s28 = sshll.u32 [#allocation5], 4
      %s29 = int_to_ptr.vmem [resolvable:$true] %s28
      %31 = dma.hbm_to_vmem [thread:$0]  %s27, 16, %s29, [#allocation6]
    $region9: #{tpu_custom_call.1} parent=1 // pred_fallthru
      _
    // Predicated region
    $region10: #{tpu_custom_call.1} parent=1 // pred_check
      _
    $region11: #{tpu_custom_call.1} parent=1 // pred_check_branch
      %33 = sbr.rel (0) target = $region13
    $region12: #{tpu_custom_call.1} parent=1 // pred_region
      %35 = dma.done [#allocation3], 16
    $region13: #{tpu_custom_call.1} parent=1 // pred_fallthru
      _
    // Predicated region
    $region14: #{tpu_custom_call.1} parent=1 // pred_check
      _
    $region15: #{tpu_custom_call.1} parent=1 // pred_check_branch
      %37 = sbr.rel (0) target = $region17
    $region16: #{tpu_custom_call.1} parent=1 // pred_region
      %39 = dma.done [#allocation6], 16
    $region17: #{tpu_custom_call.1} parent=1 // pred_fallthru
      _
    %v40 = vld [vmem:[#allocation5] sm:$0x1]
    %v41 = vld [vmem:[#allocation2] sm:$0x1]
    %43 = vset.pattern.permute.xlu0 0
    %44 = vperm.xlu0 %43, %v41
    %v45 = vpop.permute.xlu0 %44
    %v47 = vperm.slane %v45, 0
    %v48 = vmul.f32 %v47, %v40
    %v49 = vlaneseq
    %vm50 = vcmp.ge.s32.totalorder %v49, 0
    %vm51 = vcmp.lt.s32.totalorder %v49, 32
    %vm52 = vmand %vm50, %vm51
    %53 = vst.msk [vmem:[#allocation7] sm:$0x1] %vm52, %v48
    %v54 = vld [vmem:[#allocation2] sm:$0x1]
    %56 = vset.pattern.permute.xlu0 1
    %57 = vperm.xlu0 %56, %v54
    %v58 = vpop.permute.xlu0 %57
    %v60 = vperm.slane %v58, 0
    %v61 = vmul.f32 %v60, %v40
    %63 = vrot.lane.b32.xlu0 %v61, 32
    %v64 = vpop.permute.xlu0 %63
    %vm66 = vcmp.ge.s32.totalorder %v49, 32
    %vm67 = vcmp.lt.s32.totalorder %v49, 64
    %vm68 = vmand %vm66, %vm67
    %69 = vst.msk [vmem:[#allocation7] sm:$0x1] %vm68, %v64
    %v70 = vld [vmem:[#allocation2] sm:$0x1]
    %72 = vset.pattern.permute.xlu0 2
    %73 = vperm.xlu0 %72, %v70
    %v74 = vpop.permute.xlu0 %73
    %v76 = vperm.slane %v74, 0
    %v77 = vmul.f32 %v76, %v40
    %79 = vrot.lane.b32.xlu0 %v77, 64
    %v80 = vpop.permute.xlu0 %79
    %vm82 = vcmp.ge.s32.totalorder %v49, 64
    %vm83 = vcmp.lt.s32.totalorder %v49, 96
    %vm84 = vmand %vm82, %vm83
    %85 = vst.msk [vmem:[#allocation7] sm:$0x1] %vm84, %v80
    %v86 = vld [vmem:[#allocation2] sm:$0x1]
    %88 = vset.pattern.permute.xlu0 3
    %89 = vperm.xlu0 %88, %v86
    %v90 = vpop.permute.xlu0 %89
    %v92 = vperm.slane %v90, 0
    %v93 = vmul.f32 %v92, %v40
    %95 = vrot.lane.b32.xlu0 %v93, 96
    %v96 = vpop.permute.xlu0 %95
    %vm98 = vcmp.ge.s32.totalorder %v49, 96
    %vm99 = vcmp.lt.s32.totalorder %v49, 128
    %vm100 = vmand %vm98, %vm99
    %101 = vst.msk [vmem:[#allocation7] sm:$0x1] %vm100, %v96
    %v102 = vld [vmem:[#allocation2] sm:$0x1]
    %104 = vset.pattern.permute.xlu0 4
    %105 = vperm.xlu0 %104, %v102
    %v106 = vpop.permute.xlu0 %105
    %v108 = vperm.slane %v106, 0
    %v109 = vmul.f32 %v108, %v40
    %110 = vst.msk [vmem:[#allocation7 + $0x1] sm:$0x1] %vm52, %v109
    %v111 = vld [vmem:[#allocation2] sm:$0x1]
    %113 = vset.pattern.permute.xlu0 5
    %114 = vperm.xlu0 %113, %v111
    %v115 = vpop.permute.xlu0 %114
    %v117 = vperm.slane %v115, 0
    %v118 = vmul.f32 %v117, %v40
    %120 = vrot.lane.b32.xlu0 %v118, 32
    %v121 = vpop.permute.xlu0 %120
    %123 = vst.msk [vmem:[#allocation7 + $0x1] sm:$0x1] %vm68, %v121
    %v124 = vld [vmem:[#allocation2] sm:$0x1]
    %126 = vset.pattern.permute.xlu0 6
    %127 = vperm.xlu0 %126, %v124
    %v128 = vpop.permute.xlu0 %127
    %v130 = vperm.slane %v128, 0
    %v131 = vmul.f32 %v130, %v40
    %133 = vrot.lane.b32.xlu0 %v131, 64
    %v134 = vpop.permute.xlu0 %133
    %136 = vst.msk [vmem:[#allocation7 + $0x1] sm:$0x1] %vm84, %v134
    %v137 = vld [vmem:[#allocation2] sm:$0x1]
    %139 = vset.pattern.permute.xlu0 7
    %140 = vperm.xlu0 %139, %v137
    %v141 = vpop.permute.xlu0 %140
    %v143 = vperm.slane %v141, 0
    %v144 = vmul.f32 %v143, %v40
    %146 = vrot.lane.b32.xlu0 %v144, 96
    %v147 = vpop.permute.xlu0 %146
    %149 = vst.msk [vmem:[#allocation7 + $0x1] sm:$0x1] %vm100, %v147
    %v150 = vld [vmem:[#allocation2] sm:$0x1]
    %152 = vset.pattern.permute.xlu0 8
    %153 = vperm.xlu0 %152, %v150
    %v154 = vpop.permute.xlu0 %153
    %v156 = vperm.slane %v154, 0
    %v157 = vmul.f32 %v156, %v40
    %158 = vst.msk [vmem:[#allocation7 + $0x2] sm:$0x1] %vm52, %v157
    %v159 = vld [vmem:[#allocation2] sm:$0x1]
    %161 = vset.pattern.permute.xlu0 9
    %162 = vperm.xlu0 %161, %v159
    %v163 = vpop.permute.xlu0 %162
    %v165 = vperm.slane %v163, 0
    %v166 = vmul.f32 %v165, %v40
    %168 = vrot.lane.b32.xlu0 %v166, 32
    %v169 = vpop.permute.xlu0 %168
    %171 = vst.msk [vmem:[#allocation7 + $0x2] sm:$0x1] %vm68, %v169
    %v172 = vld [vmem:[#allocation2] sm:$0x1]
    %174 = vset.pattern.permute.xlu0 10
    %175 = vperm.xlu0 %174, %v172
    %v176 = vpop.permute.xlu0 %175
    %v178 = vperm.slane %v176, 0
    %v179 = vmul.f32 %v178, %v40
    %181 = vrot.lane.b32.xlu0 %v179, 64
    %v182 = vpop.permute.xlu0 %181
    %184 = vst.msk [vmem:[#allocation7 + $0x2] sm:$0x1] %vm84, %v182
    %v185 = vld [vmem:[#allocation2] sm:$0x1]
    %187 = vset.pattern.permute.xlu0 11
    %188 = vperm.xlu0 %187, %v185
    %v189 = vpop.permute.xlu0 %188
    %v191 = vperm.slane %v189, 0
    %v192 = vmul.f32 %v191, %v40
    %194 = vrot.lane.b32.xlu0 %v192, 96
    %v195 = vpop.permute.xlu0 %194
    %197 = vst.msk [vmem:[#allocation7 + $0x2] sm:$0x1] %vm100, %v195
    %v198 = vld [vmem:[#allocation2] sm:$0x1]
    %200 = vset.pattern.permute.xlu0 12
    %201 = vperm.xlu0 %200, %v198
    %v202 = vpop.permute.xlu0 %201
    %v204 = vperm.slane %v202, 0
    %v205 = vmul.f32 %v204, %v40
    %206 = vst.msk [vmem:[#allocation7 + $0x3] sm:$0x1] %vm52, %v205
    %v207 = vld [vmem:[#allocation2] sm:$0x1]
    %209 = vset.pattern.permute.xlu0 13
    %210 = vperm.xlu0 %209, %v207
    %v211 = vpop.permute.xlu0 %210
    %v213 = vperm.slane %v211, 0
    %v214 = vmul.f32 %v213, %v40
    %216 = vrot.lane.b32.xlu0 %v214, 32
    %v217 = vpop.permute.xlu0 %216
    %219 = vst.msk [vmem:[#allocation7 + $0x3] sm:$0x1] %vm68, %v217
    %v220 = vld [vmem:[#allocation2] sm:$0x1]
    %222 = vset.pattern.permute.xlu0 14
    %223 = vperm.xlu0 %222, %v220
    %v224 = vpop.permute.xlu0 %223
    %v226 = vperm.slane %v224, 0
    %v227 = vmul.f32 %v226, %v40
    %229 = vrot.lane.b32.xlu0 %v227, 64
    %v230 = vpop.permute.xlu0 %229
    %232 = vst.msk [vmem:[#allocation7 + $0x3] sm:$0x1] %vm84, %v230
    %v233 = vld [vmem:[#allocation2] sm:$0x1]
    %235 = vset.pattern.permute.xlu0 15
    %236 = vperm.xlu0 %235, %v233
    %v237 = vpop.permute.xlu0 %236
    %v239 = vperm.slane %v237, 0
    %v240 = vmul.f32 %v239, %v40
    %242 = vrot.lane.b32.xlu0 %v240, 96
    %v243 = vpop.permute.xlu0 %242
    %245 = vst.msk [vmem:[#allocation7 + $0x3] sm:$0x1] %vm100, %v243
    // Predicated region
    $region18: #{tpu_custom_call.1} parent=1 // pred_check
      _
    $region19: #{tpu_custom_call.1} parent=1 // pred_check_branch
      %247 = sbr.rel (0) target = $region21
    $region20: #{tpu_custom_call.1} parent=1 // pred_region
      %249 = vsyncadd [#allocation4], 0
      %s251 = sshll.u32 [#allocation7], 4
      %s252 = int_to_ptr.vmem [resolvable:$true] %s251
      %s253 = sshll.u32 %s2, 4
      %s254 = int_to_ptr.hbm [resolvable:$true] %s253
      %256 = dma.vmem_to_hbm [thread:$0]  %s252, 64, %s254, [#allocation4]
    $region21: #{tpu_custom_call.1} parent=1 // pred_fallthru
      _
    // Predicated region
    $region22: #{tpu_custom_call.1} parent=1 // pred_check
      _
    $region23: #{tpu_custom_call.1} parent=1 // pred_check_branch
      %258 = sbr.rel (0) target = $region25
    $region24: #{tpu_custom_call.1} parent=1 // pred_region
      %260 = dma.done [#allocation4], 64
    $region25: #{tpu_custom_call.1} parent=1 // pred_fallthru
      _
    %261 = vsyncpa [#allocation3], 1
    %262 = vsyncpa [#allocation6], 1
    %263 = vsyncpa [#allocation4], 1

</llo_original>
